<compile_context>
chip_gen: v5e
topology: v5e:2x2
jax: 0.10.0
libtpu: 0.0.40
codegen_flags: <defaults>
</compile_context>

<pallas_src>
import jax
import jax.numpy as jnp
from jax.experimental import pallas as pl
from jax.experimental.pallas import tpu as pltpu


def _round_up(x: int, m: int) -> int:
    return ((x + m - 1) // m) * m


def _chip_defaults():
    """Per-generation (tm, tn, tk, vmem_capacity_bytes, two_tensorcores)."""
    kind = ""
    try:
        kind = jax.devices()[0].device_kind.lower()
    except Exception:
        pass
    vmem_cap = None
    try:
        vmem_cap = int(pltpu.get_tpu_info().vmem_capacity_bytes)
    except Exception:
        pass

    if "v6" in kind or "6e" in kind:
        # v6e: 918 TF/s vs ~1.4 TB/s -> needs large output tiles; 128 MiB VMEM.
        tm, tn, tk = 1024, 2048, 512
        cap = vmem_cap or (128 << 20)
        two_cores = False
    elif "v5" in kind:
        # v5e: 197 TF/s vs ~0.8 TB/s -> modest tiles are enough.
        tm, tn, tk = 512, 1024, 512
        cap = vmem_cap or (128 << 20)
        two_cores = False
    elif "7" in kind:
        # v7x: 64 MiB VMEM per TC, 3.2 TB/s HBM, 2 TensorCores per chip.
        tm, tn, tk = 512, 1024, 512
        cap = vmem_cap or (64 << 20)
        two_cores = True
    else:
        # Unknown chip: conservative (fits a 64 MiB VMEM).
        tm, tn, tk = 512, 1024, 512
        cap = vmem_cap or (64 << 20)
        two_cores = False
    return tm, tn, tk, cap, two_cores


def _linear_kernel(x_ref, w_ref, b_ref, o_ref):
    # x_ref: (tm, tk) bf16, w_ref: (tk, tn) bf16, b_ref: (1, tn) f32,
    # o_ref: (tm, tn) f32 — resident across the K grid axis (accumulator).
    k = pl.program_id(2)
    partial = jnp.dot(x_ref[...], w_ref[...], preferred_element_type=jnp.float32)

    @pl.when(k == 0)
    def _first():
        # Write the first partial product directly: no zero-init store pass.
        o_ref[...] = partial

    @pl.when(k > 0)
    def _accumulate():
        o_ref[...] += partial

    @pl.when(k == pl.num_programs(2) - 1)
    def _add_bias():
        o_ref[...] += b_ref[...]


def linear_forward(x, weight, bias, *, tm=None, tn=None, tk=None):
    """y = x @ weight.T + bias   (nn.Linear forward semantics).

    x:      (M, K) float32
    weight: (N, K) float32 (PyTorch layout: out_features x in_features)
    bias:   (N,)   float32
    returns (M, N) float32
    """
    M, K = x.shape
    N, K2 = weight.shape
    assert K == K2 and bias.shape == (N,)

    dtm, dtn, dtk, vmem_cap, two_cores = _chip_defaults()
    tm = tm or dtm
    tn = tn or dtn
    tk = tk or dtk

    # Padded problem sizes: sublane (8) for M, lane (128) for N and K.
    mp, np_, kp = _round_up(M, 8), _round_up(N, 128), _round_up(K, 128)
    # Clamp tiles to the padded problem.
    tm, tn, tk = min(tm, mp), min(tn, np_), min(tk, kp)

    # On 2-TC chips keep >= 2 parallel tiles when the problem allows it so one
    # TensorCore isn't idle.
    if two_cores and (mp <= tm) and (np_ <= tn):
        if np_ >= 256:
            tn = _round_up(pl.cdiv(np_, 2), 128)
        elif mp >= 16:
            tm = _round_up(pl.cdiv(mp, 2), 8)

    # Re-pad to tile multiples.
    mp, np_, kp = _round_up(mp, tm), _round_up(np_, tn), _round_up(kp, tk)

    # bf16 operands in HBM (cast once here, fused with transpose/pad); f32 acc.
    xb = x.astype(jnp.bfloat16)
    wb = weight.T.astype(jnp.bfloat16)          # (K, N): no in-kernel transpose
    bb = bias.astype(jnp.float32).reshape(1, N)

    if (mp, kp) != (M, K):
        xb = jnp.pad(xb, ((0, mp - M), (0, kp - K)))
    if (kp, np_) != (K, N):
        wb = jnp.pad(wb, ((0, kp - K), (0, np_ - N)))
    if np_ != N:
        bb = jnp.pad(bb, ((0, 0), (0, np_ - N)))

    grid = (mp // tm, np_ // tn, kp // tk)
    grid_m, grid_n, _ = grid

    # VMEM budget: bf16 input tiles + bias (double-buffered) + f32 output tile
    # (double-buffered across (i, j); no separate accumulator scratch).
    vmem_est = (2 * (tm * tk + tk * tn) * 2
                + 2 * tn * 4
                + 2 * tm * tn * 4)
    hard_cap = int(vmem_cap * 0.875)            # leave headroom below physical
    vmem_limit = min(hard_cap, max(32 << 20, (vmem_est * 3) // 2))

    # Real DMA traffic including tile re-fetch: X read grid_n times, W read
    # grid_m times, output written once.
    cost = pl.CostEstimate(
        flops=2 * mp * np_ * kp,
        bytes_accessed=(mp * kp * 2 * grid_n
                        + kp * np_ * 2 * grid_m
                        + np_ * 4 * grid_m
                        + mp * np_ * 4),
        transcendentals=0,
    )

    out_padded = pl.pallas_call(
        _linear_kernel,
        out_shape=jax.ShapeDtypeStruct((mp, np_), jnp.float32),
        grid_spec=pltpu.PrefetchScalarGridSpec(
            num_scalar_prefetch=0,
            grid=grid,
            in_specs=[
                pl.BlockSpec((tm, tk), lambda i, j, k: (i, k)),   # X (M, K)
                pl.BlockSpec((tk, tn), lambda i, j, k: (k, j)),   # W^T (K, N)
                pl.BlockSpec((1, tn), lambda i, j, k: (0, j)),    # bias
            ],
            out_specs=pl.BlockSpec((tm, tn), lambda i, j, k: (i, j)),
        ),
        compiler_params=pltpu.CompilerParams(
            dimension_semantics=("parallel", "parallel", "arbitrary"),
            vmem_limit_bytes=int(vmem_limit),
        ),
        cost_estimate=cost,
    )(xb, wb, bb)

    return out_padded[:M, :N]


if __name__ == "__main__":
    # Small shapes consistent with the module: batch=8, input_dim=32, output_dim=16.
    batch, input_dim, output_dim = 8, 32, 16

    key = jax.random.PRNGKey(0)
    kx, kw, kb = jax.random.split(key, 3)

    x = jax.random.normal(kx, (batch, input_dim), dtype=jnp.float32)
    # Deterministic parameter init (Kaiming-uniform-ish bounds like nn.Linear).
    bound = 1.0 / (input_dim ** 0.5)
    weight = jax.random.uniform(kw, (output_dim, input_dim),
                                minval=-bound, maxval=bound, dtype=jnp.float32)
    bias = jax.random.uniform(kb, (output_dim,),
                              minval=-bound, maxval=bound, dtype=jnp.float32)

    y = jax.block_until_ready(linear_forward(x, weight, bias))
    assert y.shape == (batch, output_dim)

    # Reference on the same precision path (bf16 MXU operands, f32 accumulate).
    y_ref_bf16 = jnp.dot(x.astype(jnp.bfloat16), weight.astype(jnp.bfloat16).T,
                         preferred_element_type=jnp.float32) + bias
    assert jnp.allclose(y, y_ref_bf16, atol=1e-4, rtol=1e-4)

    # Sanity check vs the full-f32 nn.Linear reference (bf16 operand tolerance).
    # TODO(synk): offer an f32 (bf16x3) path if tighter precision is required for large K.
    y_ref_f32 = x @ weight.T + bias
    assert jnp.allclose(y, y_ref_f32, atol=2e-2, rtol=2e-2)

    print("KERNEL_OK")
</pallas_src>

<mosaic_0001>
module attributes {stable_mosaic.version = 11 : i64} {
  func.func @_linear_kernel(%arg0: i32, %arg1: i32, %arg2: i32, %arg3: memref<8x128xbf16, #tpu.memory_space<vmem>>, %arg4: memref<128x128xbf16, #tpu.memory_space<vmem>>, %arg5: memref<1x128xf32, #tpu.memory_space<vmem>>, %arg6: memref<8x128xf32, #tpu.memory_space<vmem>>) attributes {dimension_semantics = [#tpu.dimension_semantics<parallel>, #tpu.dimension_semantics<parallel>, #tpu.dimension_semantics<arbitrary>], iteration_bounds = array<i64: 1, 1, 1>, scalar_prefetch = 0 : i64, scratch_operands = 0 : i64, tpu.core_type = #tpu.core_type<tc>, window_params = [{transform_indices = @transform_0, window_bounds = array<i64: 8, 128>}, {transform_indices = @transform_1, window_bounds = array<i64: 128, 128>}, {transform_indices = @transform_2, window_bounds = array<i64: 1, 128>}, {transform_indices = @transform_3, window_bounds = array<i64: 8, 128>}]} {
    %c0 = arith.constant 0 : index
    %c0_0 = arith.constant 0 : index
    %0 = vector.load %arg3[%c0, %c0_0] : memref<8x128xbf16, #tpu.memory_space<vmem>>, vector<8x128xbf16>
    %c0_1 = arith.constant 0 : index
    %c0_2 = arith.constant 0 : index
    %1 = vector.load %arg4[%c0_1, %c0_2] : memref<128x128xbf16, #tpu.memory_space<vmem>>, vector<128x128xbf16>
    %cst = arith.constant dense<0.000000e+00> : vector<8x128xf32>
    %2 = tpu.matmul %0, %1, %cst {dimension_numbers = #tpu.dot_dimension_numbers<[1], [0], [0], [1], [0, 0, 1, 1], [], []>} : vector<8x128xbf16>, vector<128x128xbf16>, vector<8x128xf32> -> vector<8x128xf32>
    %c0_i32 = arith.constant 0 : i32
    %3 = arith.cmpi eq, %arg2, %c0_i32 : i32
    %4 = arith.extui %3 : i1 to i32
    %c0_i32_3 = arith.constant 0 : i32
    %5 = arith.cmpi ne, %4, %c0_i32_3 : i32
    scf.if %5 {
      %c0_8 = arith.constant 0 : index
      %c0_9 = arith.constant 0 : index
      %12 = vector.load %arg6[%c0_8, %c0_9] : memref<8x128xf32, #tpu.memory_space<vmem>>, vector<8x128xf32>
      tpu.vector_store %arg6[%c0_8, %c0_9], %2 {strides = array<i32>} : memref<8x128xf32, #tpu.memory_space<vmem>>, vector<8x128xf32>,
    } else {
    }
    %c0_i32_4 = arith.constant 0 : i32
    %6 = arith.cmpi sgt, %arg2, %c0_i32_4 : i32
    %7 = arith.extui %6 : i1 to i32
    %c0_i32_5 = arith.constant 0 : i32
    %8 = arith.cmpi ne, %7, %c0_i32_5 : i32
    scf.if %8 {
      %c0_8 = arith.constant 0 : index
      %c0_9 = arith.constant 0 : index
      %12 = vector.load %arg6[%c0_8, %c0_9] : memref<8x128xf32, #tpu.memory_space<vmem>>, vector<8x128xf32>
      %13 = arith.addf %12, %2 : vector<8x128xf32>
      %c0_10 = arith.constant 0 : index
      %c0_11 = arith.constant 0 : index
      %14 = vector.load %arg6[%c0_10, %c0_11] : memref<8x128xf32, #tpu.memory_space<vmem>>, vector<8x128xf32>
      tpu.vector_store %arg6[%c0_10, %c0_11], %13 {strides = array<i32>} : memref<8x128xf32, #tpu.memory_space<vmem>>, vector<8x128xf32>,
    } else {
    }
    %c0_i32_6 = arith.constant 0 : i32
    %9 = arith.cmpi eq, %arg2, %c0_i32_6 : i32
    %10 = arith.extui %9 : i1 to i32
    %c0_i32_7 = arith.constant 0 : i32
    %11 = arith.cmpi ne, %10, %c0_i32_7 : i32
    scf.if %11 {
      %c0_8 = arith.constant 0 : index
      %c0_9 = arith.constant 0 : index
      %12 = vector.load %arg6[%c0_8, %c0_9] : memref<8x128xf32, #tpu.memory_space<vmem>>, vector<8x128xf32>
      %c0_10 = arith.constant 0 : index
      %c0_11 = arith.constant 0 : index
      %13 = vector.load %arg5[%c0_10, %c0_11] : memref<1x128xf32, #tpu.memory_space<vmem>>, vector<1x128xf32>
      %14 = vector.broadcast %13 : vector<1x128xf32> to vector<8x128xf32>
      %15 = arith.addf %12, %14 : vector<8x128xf32>
      %c0_12 = arith.constant 0 : index
      %c0_13 = arith.constant 0 : index
      %16 = vector.load %arg6[%c0_12, %c0_13] : memref<8x128xf32, #tpu.memory_space<vmem>>, vector<8x128xf32>
      tpu.vector_store %arg6[%c0_12, %c0_13], %15 {strides = array<i32>} : memref<8x128xf32, #tpu.memory_space<vmem>>, vector<8x128xf32>,
    } else {
    }
    return
  }
  func.func @transform_0(%arg0: i32, %arg1: i32, %arg2: i32) -> (i32, i32) {
    %c0_i32 = arith.constant 0 : i32
    return %arg0, %arg2 : i32, i32
  }
  func.func @transform_1(%arg0: i32, %arg1: i32, %arg2: i32) -> (i32, i32) {
    %c0_i32 = arith.constant 0 : i32
    return %arg2, %arg1 : i32, i32
  }
  func.func @transform_2(%arg0: i32, %arg1: i32, %arg2: i32) -> (i32, i32) {
    %c0_i32 = arith.constant 0 : i32
    %c0_i32_0 = arith.constant 0 : i32
    return %c0_i32, %arg1 : i32, i32
  }
  func.func @transform_3(%arg0: i32, %arg1: i32, %arg2: i32) -> (i32, i32) {
    %c0_i32 = arith.constant 0 : i32
    return %arg0, %arg1 : i32, i32
  }
}

</mosaic_0001>

<llo_original>
// kernel: tpu_custom_call.1
$region0: #{tpu_custom_call.1}
  #allocation0 [shape = 'u32[]', space=smem, size = 0x4, offset = 0x4, fixed_abs, tag = 'smem constant byte address 0x4 - core index']
  #allocation1 [shape = 'u32[72,128]{1,0:T(1,128)}', space=vmem, size = 0x9000, scoped, tag = 'internal scratch']
  %s0 = inlined_call_operand.hbm [shape: bf16[8,128], index: 0, kind: input, shape index: {}]
  %s1 = inlined_call_operand.hbm [shape: bf16[128,128], index: 1, kind: input, shape index: {}]
  %s2 = inlined_call_operand.vmem [shape: f32[1,128], index: 2, kind: input, shape index: {}]
  %s3 = inlined_call_operand.hbm [shape: f32[8,128], index: 3, kind: output, shape index: {}]
  %s4 = sld [smem:[#allocation0]]
  $region42: #{tpu_custom_call.1} parent=0
    _
  %s6 = ssub.s32 1, %s4
  %s7 = scalar_select 0, %s6, %s4
  $region1: #{tpu_custom_call.1} parent=0
    #allocation2 [shape = 'u8[2048]{0}', space=vmem, size = 0x800, scoped, tag = 'input window, operand 0, single buffered']
    #allocation3 [shape = 's32[1]{0}', space=sflag, size = 0x4, scoped, tag = 'scoped memory for tpu_custom_call.1']
    #allocation4 [shape = 's32[1]{0}', space=sflag, size = 0x4, scoped, tag = 'scoped memory for tpu_custom_call.1']
    #allocation5 [shape = 'u8[32768]{0}', space=vmem, size = 0x8000, scoped, tag = 'input window, operand 1, single buffered']
    #allocation6 [shape = 's32[1]{0}', space=sflag, size = 0x4, scoped, tag = 'scoped memory for tpu_custom_call.1']
    #allocation7 [shape = 'u8[4096]{0}', space=vmem, size = 0x1000, scoped, tag = 'output window, operand 0, single buffered']
    %8 = vsyncpa [#allocation3], 0
    %9 = vsyncpa [#allocation6], 0
    %10 = vsyncpa [#allocation4], 0
    // Predicated region
    $region2: #{tpu_custom_call.1} parent=1 // pred_check
      _
    $region3: #{tpu_custom_call.1} parent=1 // pred_check_branch
      %12 = sbr.rel (0) target = $region5
    $region4: #{tpu_custom_call.1} parent=1 // pred_region
      %14 = vsyncadd [#allocation3], 0
      %s16 = sshll.u32 %s0, 4
      %s17 = int_to_ptr.hbm [resolvable:$true] %s16
      %s18 = sshll.u32 [#allocation2], 4
      %s19 = int_to_ptr.vmem [resolvable:$true] %s18
      %21 = dma.hbm_to_vmem [thread:$0]  %s17, 64, %s19, [#allocation3]
    $region5: #{tpu_custom_call.1} parent=1 // pred_fallthru
      _
    // Predicated region
    $region6: #{tpu_custom_call.1} parent=1 // pred_check
      _
    $region7: #{tpu_custom_call.1} parent=1 // pred_check_branch
      %23 = sbr.rel (0) target = $region9
    $region8: #{tpu_custom_call.1} parent=1 // pred_region
      %25 = vsyncadd [#allocation6], 0
      %s26 = sshll.u32 %s1, 4
      %s27 = int_to_ptr.hbm [resolvable:$true] %s26
      %s28 = sshll.u32 [#allocation5], 4
      %s29 = int_to_ptr.vmem [resolvable:$true] %s28
      %34 = dma.hbm_to_vmem [thread:$0]  %s27, 1024, %s29, [#allocation6], 64, 64, 4
    $region9: #{tpu_custom_call.1} parent=1 // pred_fallthru
      _
    // Predicated region
    $region10: #{tpu_custom_call.1} parent=1 // pred_check
      _
    $region11: #{tpu_custom_call.1} parent=1 // pred_check_branch
      %36 = sbr.rel (0) target = $region13
    $region12: #{tpu_custom_call.1} parent=1 // pred_region
      _
    $region13: #{tpu_custom_call.1} parent=1 // pred_fallthru
      _
    // Predicated region
    $region14: #{tpu_custom_call.1} parent=1 // pred_check
      _
    $region15: #{tpu_custom_call.1} parent=1 // pred_check_branch
      %38 = sbr.rel (0) target = $region17
    $region16: #{tpu_custom_call.1} parent=1 // pred_region
      %40 = dma.done [#allocation3], 64
    $region17: #{tpu_custom_call.1} parent=1 // pred_fallthru
      _
    // Predicated region
    $region18: #{tpu_custom_call.1} parent=1 // pred_check
      _
    $region19: #{tpu_custom_call.1} parent=1 // pred_check_branch
      %42 = sbr.rel (0) target = $region21
    $region20: #{tpu_custom_call.1} parent=1 // pred_region
      %44 = dma.done [#allocation6], 1024
    $region21: #{tpu_custom_call.1} parent=1 // pred_fallthru
      _
    %v45 = vld [vmem:[#allocation2] sm:$0xf]
    %v46 = vld [vmem:[#allocation5] sm:$0xf]
    %v47 = vld [vmem:[#allocation5 + $0x4] sm:$0xf]
    %v48 = vld [vmem:[#allocation5 + $0x8] sm:$0xf]
    %v49 = vld [vmem:[#allocation5 + $0xc] sm:$0xf]
    %v50 = vld [vmem:[#allocation5 + $0x10] sm:$0xf]
    %v51 = vld [vmem:[#allocation5 + $0x14] sm:$0xf]
    %v52 = vld [vmem:[#allocation5 + $0x18] sm:$0xf]
    %v53 = vld [vmem:[#allocation5 + $0x1c] sm:$0xf]
    %v54 = vld [vmem:[#allocation5 + $0x20] sm:$0xf]
    %v55 = vld [vmem:[#allocation5 + $0x24] sm:$0xf]
    %v56 = vld [vmem:[#allocation5 + $0x28] sm:$0xf]
    %v57 = vld [vmem:[#allocation5 + $0x2c] sm:$0xf]
    %v58 = vld [vmem:[#allocation5 + $0x30] sm:$0xf]
    %v59 = vld [vmem:[#allocation5 + $0x34] sm:$0xf]
    %v60 = vld [vmem:[#allocation5 + $0x38] sm:$0xf]
    %v61 = vld [vmem:[#allocation5 + $0x3c] sm:$0xf]
    %v78 = vunpack.c.l.b16 %v46
    %v79 = vunpack.c.l.b16 %v47
    %v80 = vunpack.c.l.b16 %v48
    %v81 = vunpack.c.l.b16 %v49
    %v82 = vunpack.c.l.b16 %v50
    %v83 = vunpack.c.l.b16 %v51
    %v84 = vunpack.c.l.b16 %v52
    %v85 = vunpack.c.l.b16 %v53
    %v86 = vunpack.c.l.b16 %v54
    %v87 = vunpack.c.l.b16 %v55
    %v88 = vunpack.c.l.b16 %v56
    %v89 = vunpack.c.l.b16 %v57
    %v90 = vunpack.c.l.b16 %v58
    %v91 = vunpack.c.l.b16 %v59
    %v92 = vunpack.c.l.b16 %v60
    %v93 = vunpack.c.l.b16 %v61
    %v94 = vpack.c.b16 %v79, %v78
    %v95 = vpack.c.b16 %v81, %v80
    %v96 = vpack.c.b16 %v83, %v82
    %v97 = vpack.c.b16 %v85, %v84
    %v98 = vpack.c.b16 %v87, %v86
    %v99 = vpack.c.b16 %v89, %v88
    %v100 = vpack.c.b16 %v91, %v90
    %v101 = vpack.c.b16 %v93, %v92
    %110 = vmatpush.bf16.msra.mxu0 %v101
    %111 = vmatpush.bf16.msra.mxu0 %v100
    %112 = vmatpush.bf16.msra.mxu0 %v99
    %113 = vmatpush.bf16.msra.mxu0 %v98
    %114 = vmatpush.bf16.msra.mxu0 %v97
    %115 = vmatpush.bf16.msra.mxu0 %v96
    %116 = vmatpush.bf16.msra.mxu0 %v95
    %117 = vmatpush.bf16.msra.mxu0 %v94
    %118 = vmatmul.bf16.gmra.mxu0 %v45
    %v119 = vpop.f32.mrf.mxu0
    %v120 = vadd.f32 0.0, %v119
    %v121 = vpop.f32.mrf.mxu0
    %122 = vdwg.mxu0
    %p123 = scmp.eq.s32.totalorder 0, 0
    // Predicated region
    $region22: #{tpu_custom_call.1} parent=1 // pred_check
      %p124 = pneg %p123
    $region23: #{tpu_custom_call.1} parent=1 // pred_check_branch
      %126 = sbr.rel (%p124) target = $region25
    $region24: #{tpu_custom_call.1} parent=1 // pred_region
      %127 = vst [vmem:[#allocation7] sm:$0xff] %v120
    $region25: #{tpu_custom_call.1} parent=1 // pred_fallthru
      _
    %p128 = scmp.gt.s32.totalorder 0, 0
    // Predicated region
    $region26: #{tpu_custom_call.1} parent=1 // pred_check
      %p129 = pneg %p128
    $region27: #{tpu_custom_call.1} parent=1 // pred_check_branch
      %131 = sbr.rel (%p129) target = $region29
    $region28: #{tpu_custom_call.1} parent=1 // pred_region
      %v132 = vld [vmem:[#allocation7] sm:$0xff]
      %v133 = vadd.f32 %v132, %v120
      %134 = vst [vmem:[#allocation7] sm:$0xff] %v133
    $region29: #{tpu_custom_call.1} parent=1 // pred_fallthru
      _
    // Predicated region
    $region30: #{tpu_custom_call.1} parent=1 // pred_check
      %p135 = pneg %p123
    $region31: #{tpu_custom_call.1} parent=1 // pred_check_branch
      %137 = sbr.rel (%p135) target = $region33
    $region32: #{tpu_custom_call.1} parent=1 // pred_region
      %v138 = vld [vmem:[#allocation7] sm:$0xff]
      %v139 = vld [vmem:[%s2] sm:$0x1]
      %v141 = vperm.slane %v139, 0
      %v143 = vadd.f32 %v138, %v141
      %144 = vst [vmem:[#allocation7] sm:$0xff] %v143
    $region33: #{tpu_custom_call.1} parent=1 // pred_fallthru
      _
    // Predicated region
    $region34: #{tpu_custom_call.1} parent=1 // pred_check
      _
    $region35: #{tpu_custom_call.1} parent=1 // pred_check_branch
      %146 = sbr.rel (0) target = $region37
    $region36: #{tpu_custom_call.1} parent=1 // pred_region
      %148 = vsyncadd [#allocation4], 0
      %s150 = sshll.u32 [#allocation7], 4
      %s151 = int_to_ptr.vmem [resolvable:$true] %s150
      %s152 = sshll.u32 %s3, 4
      %s153 = int_to_ptr.hbm [resolvable:$true] %s152
      %155 = dma.vmem_to_hbm [thread:$0]  %s151, 128, %s153, [#allocation4]
    $region37: #{tpu_custom_call.1} parent=1 // pred_fallthru
      _
    // Predicated region
    $region38: #{tpu_custom_call.1} parent=1 // pred_check
      _
    $region39: #{tpu_custom_call.1} parent=1 // pred_check_branch
      %157 = sbr.rel (0) target = $region41
    $region40: #{tpu_custom_call.1} parent=1 // pred_region
      %159 = dma.done [#allocation4], 128
    $region41: #{tpu_custom_call.1} parent=1 // pred_fallthru
      _
    %160 = vsyncpa [#allocation3], 1
    %161 = vsyncpa [#allocation6], 1
    %162 = vsyncpa [#allocation4], 1

</llo_original>
